<compile_context>
chip_gen: v6e
topology: v6e:2x2x1
jax: 0.10.0
libtpu: 0.0.40
codegen_flags: <defaults>
</compile_context>

<pallas_src>
import functools
import math

import jax
import jax.numpy as jnp
from jax import lax
from jax.experimental import pallas as pl
from jax.experimental.pallas import tpu as pltpu


def _mhsa_head_kernel(x_ref, w_ref, b_ref, pos_ref, o_ref, *, d, fuse_energy):
    # x_ref:   (1, N, C)  bf16   activations, spatial-major
    # w_ref:   (1, C, 3d) bf16   packed per-head projection, columns [k | q | v]
    # b_ref:   (1, 1, 3d) f32    packed per-head bias row
    # pos_ref: (1, N, d)  bf16   (rel_h + rel_w)^T for this head
    # o_ref:   (1, 1, N, d) f32  out^T for this (batch, head)
    f32 = jnp.float32
    bf16 = jnp.bfloat16

    # Fused [k|q|v] projection: one (N,C)@(C,3d) MXU matmul, bias broadcast on the VPU.
    proj = lax.dot_general(
        x_ref[0], w_ref[0], (((1,), (0,)), ((), ())),
        preferred_element_type=f32) + b_ref[0]                      # (N, 3d) f32

    qT = proj[:, d:2 * d]                                           # (N, d)
    vT = proj[:, 2 * d:3 * d]                                       # (N, d)

    if fuse_energy:
        # energy = [qT | posT] @ [kT | qT]^T — single K=2d contraction (fills the
        # 256-deep MXU on v6e/v7x when d=128); lane concat is tile-aligned here.
        lhs = jnp.concatenate([qT, pos_ref[0].astype(f32)], axis=1).astype(bf16)  # (N, 2d)
        kqT = proj[:, 0:2 * d].astype(bf16)                                       # (N, 2d)
        energy = lax.dot_general(lhs, kqT, (((1,), (1,)), ((), ())),
                                 preferred_element_type=f32)                      # (N, N)
    else:
        # Same math as two K=d contractions (no unaligned lane concat needed).
        kT_b = proj[:, 0:d].astype(bf16)
        qT_b = qT.astype(bf16)
        energy = (lax.dot_general(qT_b, kT_b, (((1,), (1,)), ((), ())),
                                  preferred_element_type=f32)
                  + lax.dot_general(pos_ref[0], qT_b, (((1,), (1,)), ((), ())),
                                    preferred_element_type=f32))                  # (N, N)

    # Row softmax in f32 (VPU/EUP); exact reciprocal for bit-closer parity.
    m = jnp.max(energy, axis=-1, keepdims=True)
    p = jnp.exp(energy - m)
    att = p * pl.reciprocal(jnp.sum(p, axis=-1, keepdims=True), approx=False)

    # out^T = att @ v^T : M = N rows fills the 256-row MXU on v6e/v7x.
    outT = lax.dot_general(att.astype(bf16), vT.astype(bf16), (((1,), (0,)), ((), ())),
                           preferred_element_type=f32)                            # (N, d)
    o_ref[0, 0] = outT


def mhsa_pallas(x, wq, bq, wk, bk, wv, bv, rel_h, rel_w, heads):
    """x: (B, C, W, H) NCHW float32. Returns (B, C, W, H) float32."""
    B, C, W, H = x.shape
    N = W * H
    d = C // heads
    f32, bf16 = jnp.float32, jnp.bfloat16

    # Spatial-major activations for the projection matmul: (B, N, C), channels on lanes.
    x_nc = jnp.transpose(x.reshape(B, C, N), (0, 2, 1)).astype(bf16)

    # Packed per-head 1x1-conv weights, columns [k | q | v]: (heads, C, 3d).
    wk_h = wk.reshape(heads, d, C)
    wq_h = wq.reshape(heads, d, C)
    wv_h = wv.reshape(heads, d, C)
    w_pack = jnp.transpose(jnp.concatenate([wk_h, wq_h, wv_h], axis=1),
                           (0, 2, 1)).astype(bf16)                          # (heads, C, 3d)
    b_pack = jnp.concatenate(
        [bk.reshape(heads, d), bq.reshape(heads, d), bv.reshape(heads, d)],
        axis=1).reshape(heads, 1, 3 * d).astype(f32)                        # (heads, 1, 3d)

    # Relative-position term, spatial-major per head: (heads, N, d).
    posT = jnp.transpose((rel_h + rel_w).reshape(heads, d, N),
                         (0, 2, 1)).astype(bf16)

    fuse_energy = (d % 128 == 0)   # aligned lane-concat only at production head dims
    kernel = functools.partial(_mhsa_head_kernel, d=d, fuse_energy=fuse_energy)

    flops = 2 * B * heads * (N * C * 3 * d    # fused projection
                             + N * N * 2 * d  # energy (cc + cp)
                             + N * N * d)     # att @ v
    transcendentals = B * heads * N * N       # exp
    bytes_accessed = int(2 * (x_nc.size + w_pack.size + posT.size)
                         + 4 * b_pack.size + 4 * B * heads * N * d)

    out = pl.pallas_call(
        kernel,
        out_shape=jax.ShapeDtypeStruct((B, heads, N, d), f32),
        grid=(B, heads),
        in_specs=[
            pl.BlockSpec((1, N, C), lambda b, h: (b, 0, 0)),         # x (N, C)
            pl.BlockSpec((1, C, 3 * d), lambda b, h: (h, 0, 0)),     # packed weights
            pl.BlockSpec((1, 1, 3 * d), lambda b, h: (h, 0, 0)),     # packed bias row
            pl.BlockSpec((1, N, d), lambda b, h: (h, 0, 0)),         # rel-pos^T
        ],
        out_specs=pl.BlockSpec((1, 1, N, d), lambda b, h: (b, h, 0, 0)),
        compiler_params=pltpu.CompilerParams(
            dimension_semantics=("parallel", "parallel"),
            vmem_limit_bytes=48 * 1024 * 1024),
        cost_estimate=pl.CostEstimate(flops=flops,
                                      transcendentals=transcendentals,
                                      bytes_accessed=bytes_accessed),
    )(x_nc, w_pack, b_pack, posT)

    # (B, heads, N, d) -> (B, heads, d, N) -> (B, C, W, H): wrapper-side layout fix.
    return jnp.swapaxes(out, 2, 3).reshape(B, C, W, H)


def mhsa_ref(x, wq, bq, wk, bk, wv, bv, rel_h, rel_w, heads):
    """Pure-JAX reference mirroring the PyTorch forward.

    Matmul operands are cast to bf16 with f32 accumulation so the reference uses the same
    MXU-native numerics as the kernel (precision-mode independent of backend defaults).
    """
    B, C, W, H = x.shape
    d = C // heads
    N = W * H
    f32, bf16 = jnp.float32, jnp.bfloat16
    xf = x.reshape(B, C, N)

    def conv1x1(w, b):
        y = jnp.einsum('oc,bcn->bon', w.astype(bf16), xf.astype(bf16),
                       preferred_element_type=f32) + b[None, :, None]
        return y.reshape(B, heads, d, N)

    q = conv1x1(wq, bq)
    k = conv1x1(wk, bk)
    v = conv1x1(wv, bv)
    pos = jnp.broadcast_to((rel_h + rel_w).reshape(1, heads, d, N), (B, heads, d, N))

    cc = jnp.einsum('bhdi,bhdj->bhij', q.astype(bf16), k.astype(bf16),
                    preferred_element_type=f32)
    cp = jnp.einsum('bhdi,bhdj->bhij', pos.astype(bf16), q.astype(bf16),
                    preferred_element_type=f32)
    energy = cc + cp
    att = jax.nn.softmax(energy, axis=-1)
    out = jnp.einsum('bhij,bhdj->bhdi', att.astype(bf16), v.astype(bf16),
                     preferred_element_type=f32)
    return out.reshape(B, C, W, H)


if __name__ == "__main__":
    # Small shapes consistent with the module: n_dims=16, heads=4, width=height=8.
    B, C, W, H, heads = 2, 16, 8, 8, 4
    d = C // heads

    key = jax.random.PRNGKey(0)
    k_x, k_q, k_k, k_v, k_rh, k_rw = jax.random.split(key, 6)

    # kaiming_normal_(fan_in, relu): std = sqrt(2 / fan_in), fan_in = C for a 1x1 conv;
    # conv biases zero; rel_h / rel_w ~ N(0, 1) as in the module.
    std = math.sqrt(2.0 / C)
    wq = jax.random.normal(k_q, (C, C), jnp.float32) * std
    wk = jax.random.normal(k_k, (C, C), jnp.float32) * std
    wv = jax.random.normal(k_v, (C, C), jnp.float32) * std
    bq = jnp.zeros((C,), jnp.float32)
    bk = jnp.zeros((C,), jnp.float32)
    bv = jnp.zeros((C,), jnp.float32)
    rel_h = jax.random.normal(k_rh, (1, heads, d, 1, H), jnp.float32)
    rel_w = jax.random.normal(k_rw, (1, heads, d, W, 1), jnp.float32)

    x = jax.random.normal(k_x, (B, C, W, H), jnp.float32)

    out = mhsa_pallas(x, wq, bq, wk, bk, wv, bv, rel_h, rel_w, heads)
    out = jax.block_until_ready(out)

    ref = mhsa_ref(x, wq, bq, wk, bk, wv, bv, rel_h, rel_w, heads)
    assert out.shape == (B, C, W, H)

    # Tolerance: both paths use bf16 matmul operands / f32 accumulation; residual
    # differences come from accumulation order and rare 1-ULP bf16 operand rounding
    # flips amplified (bounded by the softmax sensitivity p*(1-p) <= 0.25).
    max_err = float(jnp.max(jnp.abs(out - ref)))
    assert jnp.allclose(out, ref, atol=3e-2, rtol=3e-2), \
        f"mismatch vs reference (max abs err {max_err})"

    print("KERNEL_OK")
</pallas_src>

<mosaic_0001>
module attributes {stable_mosaic.version = 11 : i64} {
  func.func @_mhsa_head_kernel(%arg0: i32, %arg1: i32, %arg2: memref<1x64x16xbf16, #tpu.memory_space<vmem>>, %arg3: memref<1x16x12xbf16, #tpu.memory_space<vmem>>, %arg4: memref<1x1x12xf32, #tpu.memory_space<vmem>>, %arg5: memref<1x64x4xbf16, #tpu.memory_space<vmem>>, %arg6: memref<1x1x64x4xf32, #tpu.memory_space<vmem>>) attributes {dimension_semantics = [#tpu.dimension_semantics<parallel>, #tpu.dimension_semantics<parallel>], iteration_bounds = array<i64: 2, 4>, scalar_prefetch = 0 : i64, scratch_operands = 0 : i64, tpu.core_type = #tpu.core_type<tc>, window_params = [{transform_indices = @transform_0, window_bounds = array<i64: 1, 64, 16>}, {transform_indices = @transform_1, window_bounds = array<i64: 1, 16, 12>}, {transform_indices = @transform_2, window_bounds = array<i64: 1, 1, 12>}, {transform_indices = @transform_3, window_bounds = array<i64: 1, 64, 4>}, {transform_indices = @transform_4, window_bounds = array<i64: 1, 1, 64, 4>}]} {
    %c0 = arith.constant 0 : index
    %c0_0 = arith.constant 0 : index
    %c0_1 = arith.constant 0 : index
    %0 = vector.load %arg2[%c0, %c0_0, %c0_1] : memref<1x64x16xbf16, #tpu.memory_space<vmem>>, vector<1x64x16xbf16>
    %1 = vector.shape_cast %0 : vector<1x64x16xbf16> to vector<64x16xbf16>
    %c0_2 = arith.constant 0 : index
    %c0_3 = arith.constant 0 : index
    %c0_4 = arith.constant 0 : index
    %2 = vector.load %arg3[%c0_2, %c0_3, %c0_4] : memref<1x16x12xbf16, #tpu.memory_space<vmem>>, vector<1x16x12xbf16>
    %3 = vector.shape_cast %2 : vector<1x16x12xbf16> to vector<16x12xbf16>
    %cst = arith.constant dense<0.000000e+00> : vector<64x12xf32>
    %4 = tpu.matmul %1, %3, %cst {dimension_numbers = #tpu.dot_dimension_numbers<[1], [0], [0], [1], [0, 0, 1, 1], [], []>} : vector<64x16xbf16>, vector<16x12xbf16>, vector<64x12xf32> -> vector<64x12xf32>
    %c0_5 = arith.constant 0 : index
    %c0_6 = arith.constant 0 : index
    %c0_7 = arith.constant 0 : index
    %5 = vector.load %arg4[%c0_5, %c0_6, %c0_7] : memref<1x1x12xf32, #tpu.memory_space<vmem>>, vector<1x1x12xf32>
    %6 = vector.shape_cast %5 : vector<1x1x12xf32> to vector<1x12xf32>
    %7 = vector.broadcast %6 : vector<1x12xf32> to vector<64x12xf32>
    %8 = arith.addf %4, %7 : vector<64x12xf32>
    %9 = vector.extract_strided_slice %8 {offsets = [0, 4], sizes = [64, 4], strides = [1, 1]} : vector<64x12xf32> to vector<64x4xf32>
    %10 = vector.extract_strided_slice %8 {offsets = [0, 8], sizes = [64, 4], strides = [1, 1]} : vector<64x12xf32> to vector<64x4xf32>
    %11 = vector.extract_strided_slice %8 {offsets = [0, 0], sizes = [64, 4], strides = [1, 1]} : vector<64x12xf32> to vector<64x4xf32>
    %12 = arith.truncf %11 : vector<64x4xf32> to vector<64x4xbf16>
    %13 = arith.truncf %9 : vector<64x4xf32> to vector<64x4xbf16>
    %cst_8 = arith.constant dense<0.000000e+00> : vector<64x64xf32>
    %14 = tpu.matmul %13, %12, %cst_8 {dimension_numbers = #tpu.dot_dimension_numbers<[1], [1], [0], [0], [0, 0, 1, 0], [], []>} : vector<64x4xbf16>, vector<64x4xbf16>, vector<64x64xf32> -> vector<64x64xf32>
    %c0_9 = arith.constant 0 : index
    %c0_10 = arith.constant 0 : index
    %c0_11 = arith.constant 0 : index
    %15 = vector.load %arg5[%c0_9, %c0_10, %c0_11] : memref<1x64x4xbf16, #tpu.memory_space<vmem>>, vector<1x64x4xbf16>
    %16 = vector.shape_cast %15 : vector<1x64x4xbf16> to vector<64x4xbf16>
    %cst_12 = arith.constant dense<0.000000e+00> : vector<64x64xf32>
    %17 = tpu.matmul %16, %13, %cst_12 {dimension_numbers = #tpu.dot_dimension_numbers<[1], [1], [0], [0], [0, 0, 1, 0], [], []>} : vector<64x4xbf16>, vector<64x4xbf16>, vector<64x64xf32> -> vector<64x64xf32>
    %18 = arith.addf %14, %17 : vector<64x64xf32>
    %cst_13 = arith.constant dense<0xFF800000> : vector<64xf32>
    %19 = vector.multi_reduction <maximumf>, %18, %cst_13 [1] : vector<64x64xf32> to vector<64xf32>
    %20 = vector.shape_cast %19 : vector<64xf32> to vector<64x1xf32>
    %21 = vector.broadcast %20 : vector<64x1xf32> to vector<64x64xf32>
    %22 = arith.subf %18, %21 : vector<64x64xf32>
    %23 = math.exp %22 : vector<64x64xf32>
    %cst_14 = arith.constant dense<0.000000e+00> : vector<64xf32>
    %24 = vector.multi_reduction <add>, %23, %cst_14 [1] : vector<64x64xf32> to vector<64xf32>
    %25 = vector.shape_cast %24 : vector<64xf32> to vector<64x1xf32>
    %26 = tpu.reciprocal %25 : vector<64x1xf32> -> vector<64x1xf32>
    %27 = vector.broadcast %26 : vector<64x1xf32> to vector<64x64xf32>
    %28 = arith.mulf %23, %27 : vector<64x64xf32>
    %29 = arith.truncf %28 : vector<64x64xf32> to vector<64x64xbf16>
    %30 = arith.truncf %10 : vector<64x4xf32> to vector<64x4xbf16>
    %cst_15 = arith.constant dense<0.000000e+00> : vector<64x4xf32>
    %31 = tpu.matmul %29, %30, %cst_15 {dimension_numbers = #tpu.dot_dimension_numbers<[1], [0], [0], [1], [0, 0, 1, 1], [], []>} : vector<64x64xbf16>, vector<64x4xbf16>, vector<64x4xf32> -> vector<64x4xf32>
    %c0_16 = arith.constant 0 : index
    %c0_17 = arith.constant 0 : index
    %c0_18 = arith.constant 0 : index
    %c0_19 = arith.constant 0 : index
    %32 = vector.load %arg6[%c0_16, %c0_17, %c0_18, %c0_19] : memref<1x1x64x4xf32, #tpu.memory_space<vmem>>, vector<1x1x64x4xf32>
    %33 = vector.shape_cast %32 : vector<1x1x64x4xf32> to vector<64x4xf32>
    %34 = vector.shape_cast %31 : vector<64x4xf32> to vector<1x1x64x4xf32>
    tpu.vector_store %arg6[%c0_16, %c0_17, %c0_18, %c0_19], %34 {strides = array<i32>} : memref<1x1x64x4xf32, #tpu.memory_space<vmem>>, vector<1x1x64x4xf32>,
    return
  }
  func.func @transform_0(%arg0: i32, %arg1: i32) -> (i32, i32, i32) {
    %c0_i32 = arith.constant 0 : i32
    %c0_i32_0 = arith.constant 0 : i32
    %c0_i32_1 = arith.constant 0 : i32
    return %arg0, %c0_i32, %c0_i32_0 : i32, i32, i32
  }
  func.func @transform_1(%arg0: i32, %arg1: i32) -> (i32, i32, i32) {
    %c0_i32 = arith.constant 0 : i32
    %c0_i32_0 = arith.constant 0 : i32
    %c0_i32_1 = arith.constant 0 : i32
    return %arg1, %c0_i32, %c0_i32_0 : i32, i32, i32
  }
  func.func @transform_2(%arg0: i32, %arg1: i32) -> (i32, i32, i32) {
    %c0_i32 = arith.constant 0 : i32
    %c0_i32_0 = arith.constant 0 : i32
    %c0_i32_1 = arith.constant 0 : i32
    return %arg1, %c0_i32, %c0_i32_0 : i32, i32, i32
  }
  func.func @transform_3(%arg0: i32, %arg1: i32) -> (i32, i32, i32) {
    %c0_i32 = arith.constant 0 : i32
    %c0_i32_0 = arith.constant 0 : i32
    %c0_i32_1 = arith.constant 0 : i32
    return %arg1, %c0_i32, %c0_i32_0 : i32, i32, i32
  }
  func.func @transform_4(%arg0: i32, %arg1: i32) -> (i32, i32, i32, i32) {
    %c0_i32 = arith.constant 0 : i32
    %c0_i32_0 = arith.constant 0 : i32
    %c0_i32_1 = arith.constant 0 : i32
    return %arg0, %arg1, %c0_i32, %c0_i32_0 : i32, i32, i32, i32
  }
}

</mosaic_0001>

<llo_original>
// kernel: tpu_custom_call.1
$region0: #{tpu_custom_call.1}
  #allocation0 [shape = 'u32[]', space=smem, size = 0x4, offset = 0x4, fixed_abs, tag = 'smem constant byte address 0x4 - core index']
  #allocation1 [shape = 'u32[144,128]{1,0:T(1,128)}', space=vmem, size = 0x12000, scoped, tag = 'internal scratch']
  %s0 = inlined_call_operand.vmem [shape: bf16[2,64,16], index: 0, kind: input, shape index: {}]
  %s1 = inlined_call_operand.vmem [shape: bf16[4,16,12], index: 1, kind: input, shape index: {}]
  %s2 = inlined_call_operand.vmem [shape: f32[4,1,12], index: 2, kind: input, shape index: {}]
  %s3 = inlined_call_operand.vmem [shape: bf16[4,64,4], index: 3, kind: input, shape index: {}]
  %s4 = inlined_call_operand.vmem [shape: f32[2,4,64,4], index: 4, kind: output, shape index: {}]
  %s5 = sld [smem:[#allocation0]]
  $region49: #{tpu_custom_call.1} parent=0
    _
  %s7 = ssub.s32 1, %s5
  %s8 = scalar_select 0, %s7, %s5
  loop: start=0, step=1, limit=10
  $region2: #{tpu_custom_call.1} parent=0 // loop_pre_header
    _
  $region3: #{tpu_custom_call.1} parent=0 // loop_header
    %s10 = sphi 0, %s14
    %p11 = scmp.ge.s32.totalorder %s10, 10
    %s17 = sphi 0, %s29
    %s18 = sphi 0, %s25
    %s19 = sphi 0, %s17
    %s20 = sphi 0, %s18
    %s21 = sphi 0, %s19
    %s22 = sphi 0, %s20
    %s32 = sphi 0, %s34
    %s35 = sphi 0, %s32
    %s36 = sphi 0, %s35
    %s52 = sphi 0, %s36
    %s58 = sphi 0, %s60
    %s61 = sphi 0, %s58
    %s62 = sphi 0, %s61
    %s78 = sphi 0, %s62
    %s84 = sphi 0, %s86
    %s87 = sphi 0, %s84
    %s88 = sphi 0, %s87
    %s104 = sphi 0, %s88
    %s110 = sphi 0, %s112
    %s113 = sphi 0, %s110
    %s114 = sphi 0, %s113
    %s130 = sphi 0, %s114
    %s138 = sphi 0, %s140
    %s141 = sphi 0, %s138
    %s142 = sphi 0, %s141
    %s158 = sphi 0, %s142
  $region4: #{tpu_custom_call.1} parent=0 // loop_header_branch
    %13 = sbr.rel (%p11) target = $region8
  $region5: #{tpu_custom_call.1} parent=0 // loop_body
    %s15 = ssub.s32 %s10, 1
    %s16 = ssub.s32 %s10, 2
    %s23 = sadd.s32 1, %s18
    %p24 = scmp.ge.s32.totalorder %s23, 4
    %s25 = scalar_select %p24, 0, %s23
    %s26 = sadd.s32 1, %s17
    %s27 = scalar_select %p24, %s26, %s17
    %p28 = scmp.ge.s32.totalorder %s27, 2
    %s29 = scalar_select %p28, 0, %s27
    %s30 = ssub.s32 %s17, %s29
    %p31 = scmp.eq.s32.totalorder %s30, 0
    %s33 = sadd.s32 %s32, 1
    %s34 = scalar_select %p31, %s32, %s33
    %p37 = pneg %p31
    %p38 = scmp.eq.s32.totalorder %s10, 7
    %p39 = por %p37, %p38
    %p40 = scmp.ne.s32.totalorder %s32, %s35
    %p41 = scmp.eq.s32.totalorder %s10, 0
    %p42 = por %p40, %p41
    %p43 = scmp.ne.s32.totalorder %s32, %s35
    %p44 = scmp.eq.s32.totalorder %s15, 7
    %p45 = por %p43, %p44
    %p46 = scmp.ne.s32.totalorder %s35, %s36
    %p47 = scmp.eq.s32.totalorder %s15, 0
    %p48 = por %p46, %p47
    %p49 = scmp.ne.s32.totalorder %s35, %s36
    %p50 = scmp.eq.s32.totalorder %s16, 7
    %p51 = por %p49, %p50
    %p53 = scmp.ne.s32.totalorder %s36, %s52
    %p54 = scmp.eq.s32.totalorder %s16, 0
    %p55 = por %p53, %p54
    %s56 = ssub.s32 %s18, %s25
    %p57 = scmp.eq.s32.totalorder %s56, 0
    %s59 = sadd.s32 %s58, 1
    %s60 = scalar_select %p57, %s58, %s59
    %p63 = pneg %p57
    %p64 = scmp.eq.s32.totalorder %s10, 7
    %p65 = por %p63, %p64
    %p66 = scmp.ne.s32.totalorder %s58, %s61
    %p67 = scmp.eq.s32.totalorder %s10, 0
    %p68 = por %p66, %p67
    %p69 = scmp.ne.s32.totalorder %s58, %s61
    %p70 = scmp.eq.s32.totalorder %s15, 7
    %p71 = por %p69, %p70
    %p72 = scmp.ne.s32.totalorder %s61, %s62
    %p73 = scmp.eq.s32.totalorder %s15, 0
    %p74 = por %p72, %p73
    %p75 = scmp.ne.s32.totalorder %s61, %s62
    %p76 = scmp.eq.s32.totalorder %s16, 7
    %p77 = por %p75, %p76
    %p79 = scmp.ne.s32.totalorder %s62, %s78
    %p80 = scmp.eq.s32.totalorder %s16, 0
    %p81 = por %p79, %p80
    %s82 = ssub.s32 %s18, %s25
    %p83 = scmp.eq.s32.totalorder %s82, 0
    %s85 = sadd.s32 %s84, 1
    %s86 = scalar_select %p83, %s84, %s85
    %p89 = pneg %p83
    %p90 = scmp.eq.s32.totalorder %s10, 7
    %p91 = por %p89, %p90
    %p92 = scmp.ne.s32.totalorder %s84, %s87
    %p93 = scmp.eq.s32.totalorder %s10, 0
    %p94 = por %p92, %p93
    %p95 = scmp.ne.s32.totalorder %s84, %s87
    %p96 = scmp.eq.s32.totalorder %s15, 7
    %p97 = por %p95, %p96
    %p98 = scmp.ne.s32.totalorder %s87, %s88
    %p99 = scmp.eq.s32.totalorder %s15, 0
    %p100 = por %p98, %p99
    %p101 = scmp.ne.s32.totalorder %s87, %s88
    %p102 = scmp.eq.s32.totalorder %s16, 7
    %p103 = por %p101, %p102
    %p105 = scmp.ne.s32.totalorder %s88, %s104
    %p106 = scmp.eq.s32.totalorder %s16, 0
    %p107 = por %p105, %p106
    %s108 = ssub.s32 %s18, %s25
    %p109 = scmp.eq.s32.totalorder %s108, 0
    %s111 = sadd.s32 %s110, 1
    %s112 = scalar_select %p109, %s110, %s111
    %p115 = pneg %p109
    %p116 = scmp.eq.s32.totalorder %s10, 7
    %p117 = por %p115, %p116
    %p118 = scmp.ne.s32.totalorder %s110, %s113
    %p119 = scmp.eq.s32.totalorder %s10, 0
    %p120 = por %p118, %p119
    %p121 = scmp.ne.s32.totalorder %s110, %s113
    %p122 = scmp.eq.s32.totalorder %s15, 7
    %p123 = por %p121, %p122
    %p124 = scmp.ne.s32.totalorder %s113, %s114
    %p125 = scmp.eq.s32.totalorder %s15, 0
    %p126 = por %p124, %p125
    %p127 = scmp.ne.s32.totalorder %s113, %s114
    %p128 = scmp.eq.s32.totalorder %s16, 7
    %p129 = por %p127, %p128
    %p131 = scmp.ne.s32.totalorder %s114, %s130
    %p132 = scmp.eq.s32.totalorder %s16, 0
    %p133 = por %p131, %p132
    %s134 = ssub.s32 %s17, %s29
    %s135 = ssub.s32 %s18, %s25
    %s136 = sor.u32 %s134, %s135
    %p137 = scmp.eq.s32.totalorder %s136, 0
    %s139 = sadd.s32 %s138, 1
    %s140 = scalar_select %p137, %s138, %s139
    %p143 = pneg %p137
    %p144 = scmp.eq.s32.totalorder %s10, 7
    %p145 = por %p143, %p144
    %p146 = scmp.ne.s32.totalorder %s138, %s141
    %p147 = scmp.eq.s32.totalorder %s10, 0
    %p148 = por %p146, %p147
    %p149 = scmp.ne.s32.totalorder %s138, %s141
    %p150 = scmp.eq.s32.totalorder %s15, 7
    %p151 = por %p149, %p150
    %p152 = scmp.ne.s32.totalorder %s141, %s142
    %p153 = scmp.eq.s32.totalorder %s15, 0
    %p154 = por %p152, %p153
    %p155 = scmp.ne.s32.totalorder %s141, %s142
    %p156 = scmp.eq.s32.totalorder %s16, 7
    %p157 = por %p155, %p156
    %p159 = scmp.ne.s32.totalorder %s142, %s158
    %p160 = scmp.eq.s32.totalorder %s16, 0
    %p161 = por %p159, %p160
    %p162 = scmp.le.s32.totalorder 1, %s10
    %p163 = scmp.lt.s32.totalorder %s10, 9
    %p164 = pnand %p162, %p163
    %p165 = pneg %p164
    // Predicated region
    $region9: #{tpu_custom_call.1} parent=5 // pred_check
      _
    $region10: #{tpu_custom_call.1} parent=5 // pred_check_branch
      %167 = sbr.rel (%p164) target = $region12
    $region11: #{tpu_custom_call.1} parent=5 // pred_region
      %s168 = ssub.s32 %s10, 1
    $region12: #{tpu_custom_call.1} parent=5 // pred_fallthru
      _
    %p169 = scmp.lt.s32.totalorder %s10, 8
    // Predicated region
    $region13: #{tpu_custom_call.1} parent=5 // pred_check
      %p170 = pneg %p169
    $region14: #{tpu_custom_call.1} parent=5 // pred_check_branch
      %172 = sbr.rel (%p170) target = $region16
    $region15: #{tpu_custom_call.1} parent=5 // pred_region
      // Predicated region
      $region17: #{tpu_custom_call.1} parent=15 // pred_check
        %p173 = pneg %p42
      $region18: #{tpu_custom_call.1} parent=15 // pred_check_branch
        %175 = sbr.rel (%p173) target = $region20
      $region19: #{tpu_custom_call.1} parent=15 // pred_region
        %p176 = scmp.lt.s32.totalorder %s17, 1
        %s177 = scalar_select %p176, %s17, 1
        %s178 = smul.addr %s177, 8
        %s179 = smul.addr %s178, 4
        %s180 = scalar_lea.vmem %s0, %s179
      $region20: #{tpu_custom_call.1} parent=15 // pred_fallthru
        _
      // Predicated region
      $region21: #{tpu_custom_call.1} parent=15 // pred_check
        %p181 = pneg %p68
      $region22: #{tpu_custom_call.1} parent=15 // pred_check_branch
        %183 = sbr.rel (%p181) target = $region24
      $region23: #{tpu_custom_call.1} parent=15 // pred_region
        %p184 = scmp.lt.s32.totalorder %s18, 3
        %s185 = scalar_select %p184, %s18, 3
        %s186 = smul.addr %s185, 2
        %s187 = smul.addr %s186, 4
        %s188 = scalar_lea.vmem %s1, %s187
      $region24: #{tpu_custom_call.1} parent=15 // pred_fallthru
        _
      // Predicated region
      $region25: #{tpu_custom_call.1} parent=15 // pred_check
        %p189 = pneg %p94
      $region26: #{tpu_custom_call.1} parent=15 // pred_check_branch
        %191 = sbr.rel (%p189) target = $region28
      $region27: #{tpu_custom_call.1} parent=15 // pred_region
        %p192 = scmp.lt.s32.totalorder %s18, 3
        %s193 = scalar_select %p192, %s18, 3
        %s194 = scalar_lea.vmem %s2, %s193
      $region28: #{tpu_custom_call.1} parent=15 // pred_fallthru
        _
      // Predicated region
      $region29: #{tpu_custom_call.1} parent=15 // pred_check
        %p195 = pneg %p120
      $region30: #{tpu_custom_call.1} parent=15 // pred_check_branch
        %197 = sbr.rel (%p195) target = $region32
      $region31: #{tpu_custom_call.1} parent=15 // pred_region
        %p198 = scmp.lt.s32.totalorder %s18, 3
        %s199 = scalar_select %p198, %s18, 3
        %s200 = smul.addr %s199, 8
        %s201 = smul.addr %s200, 4
        %s202 = scalar_lea.vmem %s3, %s201
      $region32: #{tpu_custom_call.1} parent=15 // pred_fallthru
        _
    $region16: #{tpu_custom_call.1} parent=5 // pred_fallthru
      _
    %p203 = scmp.le.s32.totalorder 1, %s10
    %p204 = scmp.lt.s32.totalorder %s10, 9
    %p205 = pnand %p203, %p204
    %p206 = pneg %p205
    // Predicated region
    $region33: #{tpu_custom_call.1} parent=5 // pred_check
      _
    $region34: #{tpu_custom_call.1} parent=5 // pred_check_branch
      %208 = sbr.rel (%p205) target = $region36
    $region35: #{tpu_custom_call.1} parent=5 // pred_region
      %s209 = ssub.s32 %s10, 1
      %p210 = scmp.lt.s32.totalorder %s19, 1
      %s211 = scalar_select %p210, %s19, 1
      %s212 = smul.addr %s211, 8
      %s213 = smul.addr %s212, 4
      %s214 = scalar_lea.vmem %s0, %s213
      %p215 = pneg %p48
      %p216 = pneg %p45
      %p217 = scmp.lt.s32.totalorder %s20, 3
      %s218 = scalar_select %p217, %s20, 3
      %s219 = smul.addr %s218, 2
      %s220 = smul.addr %s219, 4
      %s221 = scalar_lea.vmem %s1, %s220
      %p222 = pneg %p74
      %p223 = pneg %p71
      %p224 = scmp.lt.s32.totalorder %s20, 3
      %s225 = scalar_select %p224, %s20, 3
      %s226 = scalar_lea.vmem %s2, %s225
      %p227 = pneg %p100
      %p228 = pneg %p97
      %p229 = scmp.lt.s32.totalorder %s20, 3
      %s230 = scalar_select %p229, %s20, 3
      %s231 = smul.addr %s230, 8
      %s232 = smul.addr %s231, 4
      %s233 = scalar_lea.vmem %s3, %s232
      %p234 = pneg %p126
      %p235 = pneg %p123
      %p236 = pneg %p154
      %p237 = pneg %p151
      %p238 = scmp.lt.s32.totalorder %s19, 1
      %s239 = scalar_select %p238, %s19, 1
      %p240 = scmp.lt.s32.totalorder %s20, 3
      %s241 = scalar_select %p240, %s20, 3
      %s242 = smul.addr %s241, 8
      %s243 = smul.addr %s239, 32
      %s244 = sadd.s32 %s242, %s243
      %s245 = smul.addr %s244, 8
      %s246 = scalar_lea.vmem %s4, %s245
      %p247 = scmp.lt.s32.totalorder %s19, 1
      %s248 = scalar_select %p247, %s19, 1
      %s249 = smul.addr %s248, 8
      %s250 = smul.addr %s249, 4
      %s251 = scalar_lea.vmem %s0, %s250
      %p252 = scmp.lt.s32.totalorder %s20, 3
      %s253 = scalar_select %p252, %s20, 3
      %s254 = smul.addr %s253, 2
      %s255 = smul.addr %s254, 4
      %s256 = scalar_lea.vmem %s1, %s255
      %p257 = scmp.lt.s32.totalorder %s20, 3
      %s258 = scalar_select %p257, %s20, 3
      %s259 = scalar_lea.vmem %s2, %s258
      %p260 = scmp.lt.s32.totalorder %s20, 3
      %s261 = scalar_select %p260, %s20, 3
      %s262 = smul.addr %s261, 8
      %s263 = smul.addr %s262, 4
      %s264 = scalar_lea.vmem %s3, %s263
      %p265 = scmp.lt.s32.totalorder %s19, 1
      %s266 = scalar_select %p265, %s19, 1
      %p267 = scmp.lt.s32.totalorder %s20, 3
      %s268 = scalar_select %p267, %s20, 3
      %s269 = smul.addr %s268, 8
      %s270 = smul.addr %s266, 32
      %s271 = sadd.s32 %s269, %s270
      %s272 = smul.addr %s271, 8
      %s273 = scalar_lea.vmem %s4, %s272
      %v275 = vld [vmem:[%s251] sm:$0xf]
      %v276 = vld [vmem:[%s251 + $0x4] sm:$0xf]
      %v277 = vld [vmem:[%s251 + $0x8] sm:$0xf]
      %v278 = vld [vmem:[%s251 + $0xc] sm:$0xf]
      %v279 = vld [vmem:[%s251 + $0x10] sm:$0xf]
      %v280 = vld [vmem:[%s251 + $0x14] sm:$0xf]
      %v281 = vld [vmem:[%s251 + $0x18] sm:$0xf]
      %v282 = vld [vmem:[%s251 + $0x1c] sm:$0xf]
      %v283 = vld [vmem:[%s256] sm:$0xf]
      %v284 = vld [vmem:[%s256 + $0x4] sm:$0xf]
      %v285 = vld [vmem:[%s259] sm:$0x1]
      %v287 = vlaneseq
      %v288 = vshrl.u32 %v287, 7
      %v289 = vsub.s32 0, %v288
      %v290 = vrot.slane %v285, %v289
      %v300 = vunpack.c.l.b16 %v275
      %v301 = vunpack.c.l.b16 %v276
      %v302 = vunpack.c.l.b16 %v277
      %v303 = vunpack.c.l.b16 %v278
      %v304 = vunpack.c.l.b16 %v279
      %v305 = vunpack.c.l.b16 %v280
      %v306 = vunpack.c.l.b16 %v281
      %v307 = vunpack.c.l.b16 %v282
      %v308 = vpack.c.b16 %v301, %v300
      %v309 = vpack.c.b16 %v303, %v302
      %v310 = vpack.c.b16 %v305, %v304
      %v311 = vpack.c.b16 %v307, %v306
      %v314 = vunpack.c.l.b16 %v283
      %v315 = vunpack.c.l.b16 %v284
      %v316 = vpack.c.b16 %v315, %v314
      %vm318 = vcmask 130048
      %v320 = vsel %vm318, %v308, 0
      %v323 = vsel %vm318, %v309, 0
      %v326 = vsel %vm318, %v310, 0
      %v329 = vsel %vm318, %v311, 0
      %331 = vmatprep.subr.bf16.mxu0 0
      %332 = vmatpush1.bf16.msra.mxu0 0
      %333 = vmatprep.subr.bf16.mxu0 0
      %334 = vmatpush1.bf16.msra.mxu0 0
      %335 = vmatprep.subr.bf16.mxu0 0
      %336 = vmatpush1.bf16.msra.mxu0 0
      %337 = vmatprep.subr.bf16.mxu0 0
      %338 = vmatpush1.bf16.msra.mxu0 0
      %339 = vmatprep.subr.bf16.mxu0 0
      %340 = vmatpush1.bf16.msra.mxu0 0
      %341 = vmatprep.subr.bf16.mxu0 0
      %342 = vmatpush1.bf16.msra.mxu0 0
      %343 = vmatprep.subr.bf16.mxu0 0
      %344 = vmatpush1.bf16.msra.mxu0 0
      %345 = vmatprep.subr.bf16.mxu0 0
      %346 = vmatpush1.bf16.msra.mxu0 %v316
      %347 = vmatprep.subr.bf16.mxu0 0
      %348 = vmatpush2.bf16.msra.mxu0 0
      %349 = vmatprep.subr.bf16.mxu0 0
      %350 = vmatpush2.bf16.msra.mxu0 0
      %351 = vmatprep.subr.bf16.mxu0 0
      %352 = vmatpush2.bf16.msra.mxu0 0
      %353 = vmatprep.subr.bf16.mxu0 0
      %354 = vmatpush2.bf16.msra.mxu0 0
      %355 = vmatprep.subr.bf16.mxu0 0
      %356 = vmatpush2.bf16.msra.mxu0 0
      %357 = vmatprep.subr.bf16.mxu0 0
      %358 = vmatpush2.bf16.msra.mxu0 0
      %359 = vmatprep.subr.bf16.mxu0 0
      %360 = vmatpush2.bf16.msra.mxu0 0
      %361 = vmatprep.subr.bf16.mxu0 0
      %362 = vmatpush2.bf16.msra.mxu0 0
      %363 = vmatprep.mubr.bf16.mxu0 0
      %364 = vmatmul.mubr.bf16.gmra.mxu0 %v320
      %v365 = vpop.f32.mrf.mxu0
      %v366 = vadd.f32 %v290, %v365
      %v367 = vpop.f32.mrf.mxu0
      %v368 = vpop.f32.mrf.mxu0
      %v369 = vadd.f32 %v290, %v368
      %v370 = vpop.f32.mrf.mxu0
      %371 = vmatprep.mubr.bf16.mxu0 0
      %372 = vmatmul.mubr.bf16.gmra.mxu0 %v323
      %v373 = vpop.f32.mrf.mxu0
      %v374 = vadd.f32 %v290, %v373
      %v375 = vpop.f32.mrf.mxu0
      %v376 = vpop.f32.mrf.mxu0
      %v377 = vadd.f32 %v290, %v376
      %v378 = vpop.f32.mrf.mxu0
      %379 = vmatprep.mubr.bf16.mxu0 0
      %380 = vmatmul.mubr.bf16.gmra.mxu0 %v326
      %v381 = vpop.f32.mrf.mxu0
      %v382 = vadd.f32 %v290, %v381
      %v383 = vpop.f32.mrf.mxu0
      %v384 = vpop.f32.mrf.mxu0
      %v385 = vadd.f32 %v290, %v384
      %v386 = vpop.f32.mrf.mxu0
      %387 = vmatprep.mubr.bf16.mxu0 0
      %388 = vmatmul.mubr.bf16.gmra.mxu0 %v329
      %v389 = vpop.f32.mrf.mxu0
      %v390 = vadd.f32 %v290, %v389
      %v391 = vpop.f32.mrf.mxu0
      %v392 = vpop.f32.mrf.mxu0
      %v393 = vadd.f32 %v290, %v392
      %v394 = vpop.f32.mrf.mxu0
      %395 = vdwg.mxu0
      %v396 = vpack.c.bf16 %v369, %v366
      %v397 = vpack.c.bf16 %v377, %v374
      %v398 = vpack.c.bf16 %v385, %v382
      %v399 = vpack.c.bf16 %v393, %v390
      %v400 = vld [vmem:[%s264] sm:$0xf]
      %v401 = vld [vmem:[%s264 + $0x4] sm:$0xf]
      %v402 = vld [vmem:[%s264 + $0x8] sm:$0xf]
      %v403 = vld [vmem:[%s264 + $0xc] sm:$0xf]
      %v404 = vld [vmem:[%s264 + $0x10] sm:$0xf]
      %v405 = vld [vmem:[%s264 + $0x14] sm:$0xf]
      %v406 = vld [vmem:[%s264 + $0x18] sm:$0xf]
      %v407 = vld [vmem:[%s264 + $0x1c] sm:$0xf]
      %v416 = vunpack.c.l.b16 %v400
      %v417 = vunpack.c.l.b16 %v401
      %v418 = vunpack.c.l.b16 %v402
      %v419 = vunpack.c.l.b16 %v403
      %v420 = vunpack.c.l.b16 %v404
      %v421 = vunpack.c.l.b16 %v405
      %v422 = vunpack.c.l.b16 %v406
      %v423 = vunpack.c.l.b16 %v407
      %v424 = vpack.c.b16 %v417, %v416
      %v425 = vpack.c.b16 %v419, %v418
      %v426 = vpack.c.b16 %v421, %v420
      %v427 = vpack.c.b16 %v423, %v422
      %432 = vrot.lane.b32.xlu0 %v396, 124
      %v433 = vpop.permute.xlu0 %432
      %434 = vrot.lane.b32.xlu0 %v397, 124
      %v435 = vpop.permute.xlu0 %434
      %436 = vrot.lane.b32.xlu0 %v398, 124
      %v437 = vpop.permute.xlu0 %436
      %438 = vrot.lane.b32.xlu0 %v399, 124
      %v439 = vpop.permute.xlu0 %438
      %vm440 = vcmask 31744
      %v442 = vsel %vm440, %v424, 0
      %v445 = vsel %vm440, %v425, 0
      %v448 = vsel %vm440, %v426, 0
      %v451 = vsel %vm440, %v427, 0
      %v454 = vsel %vm440, %v433, 0
      %v457 = vsel %vm440, %v435, 0
      %v460 = vsel %vm440, %v437, 0
      %v463 = vsel %vm440, %v439, 0
      %465 = vmatprep.subr.bf16.mxu0 0
      %466 = vmatpush1.bf16.xpose.msra.mxu0 0
      %467 = vmatprep.subr.bf16.mxu0 0
      %468 = vmatpush1.bf16.xpose.msra.mxu0 0
      %469 = vmatprep.subr.bf16.mxu0 0
      %470 = vmatpush1.bf16.xpose.msra.mxu0 0
      %471 = vmatprep.subr.bf16.mxu0 0
      %472 = vmatpush1.bf16.xpose.msra.mxu0 0
      %473 = vmatprep.subr.bf16.mxu0 0
      %474 = vmatpush1.bf16.xpose.msra.mxu0 %v463
      %475 = vmatprep.subr.bf16.mxu0 0
      %476 = vmatpush1.bf16.xpose.msra.mxu0 %v460
      %477 = vmatprep.subr.bf16.mxu0 0
      %478 = vmatpush1.bf16.xpose.msra.mxu0 %v457
      %479 = vmatprep.subr.bf16.mxu0 0
      %480 = vmatpush1.bf16.xpose.msra.mxu0 %v454
      %481 = vmatprep.subr.bf16.mxu0 0
      %482 = vmatpush2.bf16.xpose.msra.mxu0 0
      %483 = vmatprep.subr.bf16.mxu0 0
      %484 = vmatpush2.bf16.xpose.msra.mxu0 0
      %485 = vmatprep.subr.bf16.mxu0 0
      %486 = vmatpush2.bf16.xpose.msra.mxu0 0
      %487 = vmatprep.subr.bf16.mxu0 0
      %488 = vmatpush2.bf16.xpose.msra.mxu0 0
      %489 = vmatprep.subr.bf16.mxu0 0
      %490 = vmatpush2.bf16.xpose.msra.mxu0 0
      %491 = vmatprep.subr.bf16.mxu0 0
      %492 = vmatpush2.bf16.xpose.msra.mxu0 0
      %493 = vmatprep.subr.bf16.mxu0 0
      %494 = vmatpush2.bf16.xpose.msra.mxu0 0
      %495 = vmatprep.subr.bf16.mxu0 0
      %496 = vmatpush2.bf16.xpose.msra.mxu0 0
      %497 = vmatprep.mubr.bf16.mxu0 0
      %498 = vmatmul.mubr.bf16.gmra.mxu0 %v442
      %v499 = vpop.f32.mrf.mxu0
      %v500 = vadd.f32 0.0, %v499
      %v501 = vpop.f32.mrf.mxu0
      %v502 = vpop.f32.mrf.mxu0
      %v503 = vadd.f32 0.0, %v502
      %v504 = vpop.f32.mrf.mxu0
      %505 = vmatprep.mubr.bf16.mxu0 0
      %506 = vmatmul.mubr.bf16.gmra.mxu0 %v445
      %v507 = vpop.f32.mrf.mxu0
      %v508 = vadd.f32 0.0, %v507
      %v509 = vpop.f32.mrf.mxu0
      %v510 = vpop.f32.mrf.mxu0
      %v511 = vadd.f32 0.0, %v510
      %v512 = vpop.f32.mrf.mxu0
      %513 = vmatprep.mubr.bf16.mxu0 0
      %514 = vmatmul.mubr.bf16.gmra.mxu0 %v448
      %v515 = vpop.f32.mrf.mxu0
      %v516 = vadd.f32 0.0, %v515
      %v517 = vpop.f32.mrf.mxu0
      %v518 = vpop.f32.mrf.mxu0
      %v519 = vadd.f32 0.0, %v518
      %v520 = vpop.f32.mrf.mxu0
      %521 = vmatprep.mubr.bf16.mxu0 0
      %522 = vmatmul.mubr.bf16.gmra.mxu0 %v451
      %v523 = vpop.f32.mrf.mxu0
      %v524 = vadd.f32 0.0, %v523
      %v525 = vpop.f32.mrf.mxu0
      %v526 = vpop.f32.mrf.mxu0
      %v527 = vadd.f32 0.0, %v526
      %v528 = vpop.f32.mrf.mxu0
      %529 = vdwg.mxu0
      %v531 = vsel %vm440, %v396, 0
      %v534 = vsel %vm440, %v397, 0
      %v537 = vsel %vm440, %v398, 0
      %v540 = vsel %vm440, %v399, 0
      %542 = vmatprep.subr.bf16.mxu0 0
      %543 = vmatpush1.bf16.xpose.msra.mxu0 0
      %544 = vmatprep.subr.bf16.mxu0 0
      %545 = vmatpush1.bf16.xpose.msra.mxu0 0
      %546 = vmatprep.subr.bf16.mxu0 0
      %547 = vmatpush1.bf16.xpose.msra.mxu0 0
      %548 = vmatprep.subr.bf16.mxu0 0
      %549 = vmatpush1.bf16.xpose.msra.mxu0 0
      %550 = vmatprep.subr.bf16.mxu0 0
      %551 = vmatpush1.bf16.xpose.msra.mxu0 %v540
      %552 = vmatprep.subr.bf16.mxu0 0
      %553 = vmatpush1.bf16.xpose.msra.mxu0 %v537
      %554 = vmatprep.subr.bf16.mxu0 0
      %555 = vmatpush1.bf16.xpose.msra.mxu0 %v534
      %556 = vmatprep.subr.bf16.mxu0 0
      %557 = vmatpush1.bf16.xpose.msra.mxu0 %v531
      %558 = vmatprep.subr.bf16.mxu0 0
      %559 = vmatpush2.bf16.xpose.msra.mxu0 0
      %560 = vmatprep.subr.bf16.mxu0 0
      %561 = vmatpush2.bf16.xpose.msra.mxu0 0
      %562 = vmatprep.subr.bf16.mxu0 0
      %563 = vmatpush2.bf16.xpose.msra.mxu0 0
      %564 = vmatprep.subr.bf16.mxu0 0
      %565 = vmatpush2.bf16.xpose.msra.mxu0 0
      %566 = vmatprep.subr.bf16.mxu0 0
      %567 = vmatpush2.bf16.xpose.msra.mxu0 0
      %568 = vmatprep.subr.bf16.mxu0 0
      %569 = vmatpush2.bf16.xpose.msra.mxu0 0
      %570 = vmatprep.subr.bf16.mxu0 0
      %571 = vmatpush2.bf16.xpose.msra.mxu0 0
      %572 = vmatprep.subr.bf16.mxu0 0
      %573 = vmatpush2.bf16.xpose.msra.mxu0 0
      %574 = vmatprep.mubr.bf16.mxu0 0
      %575 = vmatmul.mubr.bf16.gmra.mxu0 %v454
      %v576 = vpop.f32.mrf.mxu0
      %v577 = vadd.f32 %v500, %v576
      %v578 = vpop.f32.mrf.mxu0
      %v579 = vpop.f32.mrf.mxu0
      %v580 = vadd.f32 %v503, %v579
      %v581 = vpop.f32.mrf.mxu0
      %582 = vmatprep.mubr.bf16.mxu0 0
      %583 = vmatmul.mubr.bf16.gmra.mxu0 %v457
      %v584 = vpop.f32.mrf.mxu0
      %v585 = vadd.f32 %v508, %v584
      %v586 = vpop.f32.mrf.mxu0
      %v587 = vpop.f32.mrf.mxu0
      %v588 = vadd.f32 %v511, %v587
      %v589 = vpop.f32.mrf.mxu0
      %590 = vmatprep.mubr.bf16.mxu0 0
      %591 = vmatmul.mubr.bf16.gmra.mxu0 %v460
      %v592 = vpop.f32.mrf.mxu0
      %v593 = vadd.f32 %v516, %v592
      %v594 = vpop.f32.mrf.mxu0
      %v595 = vpop.f32.mrf.mxu0
      %v596 = vadd.f32 %v519, %v595
      %v597 = vpop.f32.mrf.mxu0
      %598 = vmatprep.mubr.bf16.mxu0 0
      %599 = vmatmul.mubr.bf16.gmra.mxu0 %v463
      %v600 = vpop.f32.mrf.mxu0
      %v601 = vadd.f32 %v524, %v600
      %v602 = vpop.f32.mrf.mxu0
      %v603 = vpop.f32.mrf.mxu0
      %v604 = vadd.f32 %v527, %v603
      %v605 = vpop.f32.mrf.mxu0
      %606 = vdwg.mxu0
      %vm607 = vcmask 523264
      %v608 = vsel %vm607, %v577, -inf
      %609 = vmax.xlane.f32.xlu0 %v608
      %v610 = vpop.xlane.xlu0 %609
      %v611 = vsel %vm607, %v580, -inf
      %612 = vmax.xlane.f32.xlu0 %v611
      %v613 = vpop.xlane.xlu0 %612
      %v614 = vsel %vm607, %v585, -inf
      %615 = vmax.xlane.f32.xlu0 %v614
      %v616 = vpop.xlane.xlu0 %615
      %v617 = vsel %vm607, %v588, -inf
      %618 = vmax.xlane.f32.xlu0 %v617
      %v619 = vpop.xlane.xlu0 %618
      %v620 = vsel %vm607, %v593, -inf
      %621 = vmax.xlane.f32.xlu0 %v620
      %v622 = vpop.xlane.xlu0 %621
      %v623 = vsel %vm607, %v596, -inf
      %624 = vmax.xlane.f32.xlu0 %v623
      %v625 = vpop.xlane.xlu0 %624
      %v626 = vsel %vm607, %v601, -inf
      %627 = vmax.xlane.f32.xlu0 %v626
      %v628 = vpop.xlane.xlu0 %627
      %v629 = vsel %vm607, %v604, -inf
      %630 = vmax.xlane.f32.xlu0 %v629
      %v631 = vpop.xlane.xlu0 %630
      %v632 = vsub.f32 %v577, %v610
      %v633 = vsub.f32 %v580, %v613
      %v634 = vsub.f32 %v585, %v616
      %v635 = vsub.f32 %v588, %v619
      %v636 = vsub.f32 %v593, %v622
      %v637 = vsub.f32 %v596, %v625
      %v638 = vsub.f32 %v601, %v628
      %v639 = vsub.f32 %v604, %v631
      %v640 = vmul.f32 %v632, 1.442695
      %v641 = vpow.pop %v640
      %v642 = vmul.f32 %v633, 1.442695
      %v643 = vpow.pop %v642
      %v644 = vmul.f32 %v634, 1.442695
      %v645 = vpow.pop %v644
      %v646 = vmul.f32 %v635, 1.442695
      %v647 = vpow.pop %v646
      %v648 = vmul.f32 %v636, 1.442695
      %v649 = vpow.pop %v648
      %v650 = vmul.f32 %v637, 1.442695
      %v651 = vpow.pop %v650
      %v652 = vmul.f32 %v638, 1.442695
      %v653 = vpow.pop %v652
      %v654 = vmul.f32 %v639, 1.442695
      %v655 = vpow.pop %v654
      %v656 = vsel %vm607, %v641, 0.0
      %657 = vadd.xlane.f32.xlu0 %v656
      %v658 = vpop.xlane.xlu0 %657
      %v659 = vsel %vm607, %v643, 0.0
      %660 = vadd.xlane.f32.xlu0 %v659
      %v661 = vpop.xlane.xlu0 %660
      %v662 = vsel %vm607, %v645, 0.0
      %663 = vadd.xlane.f32.xlu0 %v662
      %v664 = vpop.xlane.xlu0 %663
      %v665 = vsel %vm607, %v647, 0.0
      %666 = vadd.xlane.f32.xlu0 %v665
      %v667 = vpop.xlane.xlu0 %666
      %v668 = vsel %vm607, %v649, 0.0
      %669 = vadd.xlane.f32.xlu0 %v668
      %v670 = vpop.xlane.xlu0 %669
      %v671 = vsel %vm607, %v651, 0.0
      %672 = vadd.xlane.f32.xlu0 %v671
      %v673 = vpop.xlane.xlu0 %672
      %v674 = vsel %vm607, %v653, 0.0
      %675 = vadd.xlane.f32.xlu0 %v674
      %v676 = vpop.xlane.xlu0 %675
      %v677 = vsel %vm607, %v655, 0.0
      %678 = vadd.xlane.f32.xlu0 %v677
      %v679 = vpop.xlane.xlu0 %678
      %v680 = vrcp.pop %v658
      %v681 = vrcp.pop %v661
      %v682 = vrcp.pop %v664
      %v683 = vrcp.pop %v667
      %v684 = vrcp.pop %v670
      %v685 = vrcp.pop %v673
      %v686 = vrcp.pop %v676
      %v687 = vrcp.pop %v679
      %v688 = vmul.f32 %v641, %v680
      %v689 = vmul.f32 %v643, %v681
      %v690 = vmul.f32 %v645, %v682
      %v691 = vmul.f32 %v647, %v683
      %v692 = vmul.f32 %v649, %v684
      %v693 = vmul.f32 %v651, %v685
      %v694 = vmul.f32 %v653, %v686
      %v695 = vmul.f32 %v655, %v687
      %v696 = vpack.c.bf16 %v689, %v688
      %v697 = vpack.c.bf16 %v691, %v690
      %v698 = vpack.c.bf16 %v693, %v692
      %v699 = vpack.c.bf16 %v695, %v694
      %700 = vrot.lane.b32.xlu0 %v396, 120
      %v701 = vpop.permute.xlu0 %700
      %702 = vrot.lane.b32.xlu0 %v397, 120
      %v703 = vpop.permute.xlu0 %702
      %704 = vrot.lane.b32.xlu0 %v398, 120
      %v705 = vpop.permute.xlu0 %704
      %706 = vrot.lane.b32.xlu0 %v399, 120
      %v707 = vpop.permute.xlu0 %706
      %v713 = vsel %vm607, %v696, 0
      %v716 = vsel %vm607, %v697, 0
      %v719 = vsel %vm607, %v698, 0
      %v722 = vsel %vm607, %v699, 0
      %724 = vmatprep.subr.bf16.mxu0 0
      %725 = vmatpush1.bf16.msra.mxu0 0
      %726 = vmatprep.subr.bf16.mxu0 0
      %727 = vmatpush1.bf16.msra.mxu0 0
      %728 = vmatprep.subr.bf16.mxu0 0
      %729 = vmatpush1.bf16.msra.mxu0 0
      %730 = vmatprep.subr.bf16.mxu0 0
      %731 = vmatpush1.bf16.msra.mxu0 0
      %732 = vmatprep.subr.bf16.mxu0 0
      %733 = vmatpush1.bf16.msra.mxu0 %v707
      %734 = vmatprep.subr.bf16.mxu0 0
      %735 = vmatpush1.bf16.msra.mxu0 %v705
      %736 = vmatprep.subr.bf16.mxu0 0
      %737 = vmatpush1.bf16.msra.mxu0 %v703
      %738 = vmatprep.subr.bf16.mxu0 0
      %739 = vmatpush1.bf16.msra.mxu0 %v701
      %740 = vmatprep.subr.bf16.mxu0 0
      %741 = vmatpush2.bf16.msra.mxu0 0
      %742 = vmatprep.subr.bf16.mxu0 0
      %743 = vmatpush2.bf16.msra.mxu0 0
      %744 = vmatprep.subr.bf16.mxu0 0
      %745 = vmatpush2.bf16.msra.mxu0 0
      %746 = vmatprep.subr.bf16.mxu0 0
      %747 = vmatpush2.bf16.msra.mxu0 0
      %748 = vmatprep.subr.bf16.mxu0 0
      %749 = vmatpush2.bf16.msra.mxu0 0
      %750 = vmatprep.subr.bf16.mxu0 0
      %751 = vmatpush2.bf16.msra.mxu0 0
      %752 = vmatprep.subr.bf16.mxu0 0
      %753 = vmatpush2.bf16.msra.mxu0 0
      %754 = vmatprep.subr.bf16.mxu0 0
      %755 = vmatpush2.bf16.msra.mxu0 0
      %756 = vmatprep.mubr.bf16.mxu0 0
      %757 = vmatmul.mubr.bf16.gmra.mxu0 %v713
      %v758 = vpop.f32.mrf.mxu0
      %v759 = vadd.f32 0.0, %v758
      %v760 = vpop.f32.mrf.mxu0
      %v761 = vpop.f32.mrf.mxu0
      %v762 = vadd.f32 0.0, %v761
      %v763 = vpop.f32.mrf.mxu0
      %764 = vmatprep.mubr.bf16.mxu0 0
      %765 = vmatmul.mubr.bf16.gmra.mxu0 %v716
      %v766 = vpop.f32.mrf.mxu0
      %v767 = vadd.f32 0.0, %v766
      %v768 = vpop.f32.mrf.mxu0
      %v769 = vpop.f32.mrf.mxu0
      %v770 = vadd.f32 0.0, %v769
      %v771 = vpop.f32.mrf.mxu0
      %772 = vmatprep.mubr.bf16.mxu0 0
      %773 = vmatmul.mubr.bf16.gmra.mxu0 %v719
      %v774 = vpop.f32.mrf.mxu0
      %v775 = vadd.f32 0.0, %v774
      %v776 = vpop.f32.mrf.mxu0
      %v777 = vpop.f32.mrf.mxu0
      %v778 = vadd.f32 0.0, %v777
      %v779 = vpop.f32.mrf.mxu0
      %780 = vmatprep.mubr.bf16.mxu0 0
      %781 = vmatmul.mubr.bf16.gmra.mxu0 %v722
      %v782 = vpop.f32.mrf.mxu0
      %v783 = vadd.f32 0.0, %v782
      %v784 = vpop.f32.mrf.mxu0
      %v785 = vpop.f32.mrf.mxu0
      %v786 = vadd.f32 0.0, %v785
      %v787 = vpop.f32.mrf.mxu0
      %788 = vdwg.mxu0
      %789 = vst.msk [vmem:[%s273] sm:$0xff] %vm440, %v759
      %790 = vst.msk [vmem:[%s273 + $0x8] sm:$0xff] %vm440, %v762
      %791 = vst.msk [vmem:[%s273 + $0x10] sm:$0xff] %vm440, %v767
      %792 = vst.msk [vmem:[%s273 + $0x18] sm:$0xff] %vm440, %v770
      %793 = vst.msk [vmem:[%s273 + $0x20] sm:$0xff] %vm440, %v775
      %794 = vst.msk [vmem:[%s273 + $0x28] sm:$0xff] %vm440, %v778
      %795 = vst.msk [vmem:[%s273 + $0x30] sm:$0xff] %vm440, %v783
      %796 = vst.msk [vmem:[%s273 + $0x38] sm:$0xff] %vm440, %v786
      %p797 = scmp.lt.s32.totalorder %s19, 1
      %s798 = scalar_select %p797, %s19, 1
      %p799 = scmp.lt.s32.totalorder %s20, 3
      %s800 = scalar_select %p799, %s20, 3
      %s801 = smul.addr %s800, 8
      %s802 = smul.addr %s798, 32
      %s803 = sadd.s32 %s801, %s802
      %s804 = smul.addr %s803, 8
      %s805 = scalar_lea.vmem %s4, %s804
      // Predicated region
      $region37: #{tpu_custom_call.1} parent=35 // pred_check
        %p806 = pneg %p151
      $region38: #{tpu_custom_call.1} parent=35 // pred_check_branch
        %808 = sbr.rel (%p806) target = $region40
      $region39: #{tpu_custom_call.1} parent=35 // pred_region
        _
      $region40: #{tpu_custom_call.1} parent=35 // pred_fallthru
        _
    $region36: #{tpu_custom_call.1} parent=5 // pred_fallthru
      _
    %p809 = scmp.le.s32.totalorder 2, %s10
    // Predicated region
    $region41: #{tpu_custom_call.1} parent=5 // pred_check
      %p810 = pneg %p809
    $region42: #{tpu_custom_call.1} parent=5 // pred_check_branch
      %812 = sbr.rel (%p810) target = $region44
    $region43: #{tpu_custom_call.1} parent=5 // pred_region
      %s813 = ssub.s32 %s10, 2
      // Predicated region
      $region45: #{tpu_custom_call.1} parent=43 // pred_check
        %p814 = pneg %p157
      $region46: #{tpu_custom_call.1} parent=43 // pred_check_branch
        %816 = sbr.rel (%p814) target = $region48
      $region47: #{tpu_custom_call.1} parent=43 // pred_region
        %p817 = scmp.lt.s32.totalorder %s21, 1
        %s818 = scalar_select %p817, %s21, 1
        %p819 = scmp.lt.s32.totalorder %s22, 3
        %s820 = scalar_select %p819, %s22, 3
        %s821 = smul.addr %s820, 8
        %s822 = smul.addr %s818, 32
        %s823 = sadd.s32 %s821, %s822
        %s824 = smul.addr %s823, 8
        %s825 = scalar_lea.vmem %s4, %s824
      $region48: #{tpu_custom_call.1} parent=43 // pred_fallthru
        _
    $region44: #{tpu_custom_call.1} parent=5 // pred_fallthru
      _
  $region6: #{tpu_custom_call.1} parent=0 // loop_footer
    %s14 = sadd.s32 1, %s10
  $region7: #{tpu_custom_call.1} parent=0 // loop_footer_branch
    %9 = sbr.rel target = $region3
  $region8: #{tpu_custom_call.1} parent=0 // loop_exit
    _

</llo_original>
